<compile_context>
chip_gen: v6e
topology: v6e:2x2x1
jax: 0.10.0
libtpu: 0.0.40
codegen_flags: <defaults>
</compile_context>

<pallas_src>
import functools

import jax
import jax.numpy as jnp
from jax.experimental import pallas as pl
from jax.experimental.pallas import tpu as pltpu


def _round_up(x, m):
    return ((x + m - 1) // m) * m


# ----------------------------------------------------------------------------
# Kernels
# ----------------------------------------------------------------------------
def _sdl_kernel_identity(k, d, num_pos, num_dep,
                         x_ref, wall_ref, ball_ref,
                         rec_ref, s_ref, pos_ref, dep_ref):
    """Identity path: single fused matmul against the folded weight.

    x_ref    : (bb, d)
    wall_ref : (d, k + d + num_pos + num_dep)   [Ws^T | Ws^T@Wd^T | Ws^T@Wpos^T | Ws^T@Wdep^T]
    ball_ref : (1, k + d + num_pos + num_dep)   [0_k  | 0_d       | b_pos       | b_dep      ]
    """
    y = jnp.dot(x_ref[...], wall_ref[...],
                preferred_element_type=jnp.float32) + ball_ref[...]
    s_ref[...] = y[:, :k].astype(s_ref.dtype)
    rec_ref[...] = y[:, k:k + d].astype(rec_ref.dtype)
    pos_ref[...] = y[:, k + d:k + d + num_pos].astype(pos_ref.dtype)
    dep_ref[...] = y[:, k + d + num_pos:k + d + num_pos + num_dep].astype(
        dep_ref.dtype)


def _sdl_kernel_relu(d, num_pos, num_dep,
                     x_ref, ws_ref, w2_ref, b2_ref,
                     rec_ref, s_ref, pos_ref, dep_ref):
    """ReLU path: S = relu(X @ Ws^T), then one fused matmul for rec/pos/dep.

    x_ref  : (bb, d)
    ws_ref : (d, k)
    w2_ref : (k, d + num_pos + num_dep)   [W_D^T | W_pos^T | W_dep^T]
    b2_ref : (1, d + num_pos + num_dep)   [0_d   | b_pos   | b_dep  ]
    """
    x = x_ref[...]
    s = jnp.maximum(
        jnp.dot(x, ws_ref[...], preferred_element_type=jnp.float32), 0.0)
    y = jnp.dot(s, w2_ref[...],
                preferred_element_type=jnp.float32) + b2_ref[...]
    s_ref[...] = s.astype(s_ref.dtype)
    rec_ref[...] = y[:, :d].astype(rec_ref.dtype)
    pos_ref[...] = y[:, d:d + num_pos].astype(pos_ref.dtype)
    dep_ref[...] = y[:, d + num_pos:d + num_pos + num_dep].astype(dep_ref.dtype)


# ----------------------------------------------------------------------------
# One-time parameter preparation (hoisted out of the per-call hot path)
# ----------------------------------------------------------------------------
def prepare_params(params, nonlinearity="identity"):
    """Build the fused weight layout once (call outside the forward hot loop)."""
    w_s, w_d = params["W_S"], params["W_D"]            # (k, d), (d, k)
    w_pos, b_pos = params["W_pos"], params["b_pos"]    # (num_pos, k), (num_pos,)
    w_dep, b_dep = params["W_dep"], params["b_dep"]    # (num_dep, k), (num_dep,)
    k, d = w_s.shape
    num_pos, num_dep = w_pos.shape[0], w_dep.shape[0]
    dtype = w_s.dtype

    # Concatenated second-stage weight / bias: [x_rec | pos | dep]
    w2 = jnp.concatenate([w_d.T, w_pos.T, w_dep.T], axis=1)            # (k, n2)
    b2 = jnp.concatenate(
        [jnp.zeros((d,), dtype), b_pos, b_dep])[None, :]               # (1, n2)

    dims = (d, k, num_pos, num_dep)
    if nonlinearity == "relu":
        return {"mode": "relu", "ws_t": jnp.asarray(w_s.T), "w2": w2,
                "b2": b2, "dims": dims}

    # Identity: fold the second matmul into the first.
    ws_t = jnp.asarray(w_s.T)                                          # (d, k)
    w_fold = jnp.dot(ws_t, w2, precision=jax.lax.Precision.HIGHEST)    # (d, n2)
    w_all = jnp.concatenate([ws_t, w_fold], axis=1)                    # (d, k+n2)
    b_all = jnp.concatenate([jnp.zeros((1, k), dtype), b2], axis=1)    # (1, k+n2)
    return {"mode": "identity", "w_all": w_all, "b_all": b_all, "dims": dims}


# ----------------------------------------------------------------------------
# Forward pass
# ----------------------------------------------------------------------------
def supervised_dictionary_learning(x, prepared, block_b=4096, out_dtype=None):
    """Fused Pallas forward.  Returns (x_rec, S, pos_logits, dep_logits)."""
    d, k, num_pos, num_dep = prepared["dims"]
    B = x.shape[0]
    out_dtype = out_dtype or x.dtype
    n2 = d + num_pos + num_dep

    # Batch block: multiple of 8 rows; at least 2 grid steps whenever B > 8 so
    # v7x's two TensorCores both get work.  Trailing partial block is masked
    # by Pallas (no jnp.pad copy of X).
    bb = min(block_b, max(8, _round_up(pl.cdiv(B, 2), 8)))
    grid = (pl.cdiv(B, bb),)

    out_shape = (
        jax.ShapeDtypeStruct((B, d), out_dtype),        # x_rec
        jax.ShapeDtypeStruct((B, k), out_dtype),        # S
        jax.ShapeDtypeStruct((B, num_pos), out_dtype),  # pos_logits
        jax.ShapeDtypeStruct((B, num_dep), out_dtype),  # dep_logits
    )
    out_specs = [
        pl.BlockSpec((bb, d), lambda i: (i, 0)),
        pl.BlockSpec((bb, k), lambda i: (i, 0)),
        pl.BlockSpec((bb, num_pos), lambda i: (i, 0)),
        pl.BlockSpec((bb, num_dep), lambda i: (i, 0)),
    ]

    in_itemsize = jnp.dtype(x.dtype).itemsize
    out_bytes = B * (d + k + num_pos + num_dep) * jnp.dtype(out_dtype).itemsize

    if prepared["mode"] == "identity":
        w_all, b_all = prepared["w_all"], prepared["b_all"]
        kernel = functools.partial(_sdl_kernel_identity, k, d, num_pos, num_dep)
        in_specs = [
            pl.BlockSpec((bb, d), lambda i: (i, 0)),            # X rows
            pl.BlockSpec(w_all.shape, lambda i: (0, 0)),        # folded weight
            pl.BlockSpec(b_all.shape, lambda i: (0, 0)),        # folded bias
        ]
        operands = (x, w_all, b_all)
        flops = 2 * B * d * (k + n2)
        bytes_accessed = (x.size + w_all.size + b_all.size) * in_itemsize + out_bytes
    else:
        ws_t, w2, b2 = prepared["ws_t"], prepared["w2"], prepared["b2"]
        kernel = functools.partial(_sdl_kernel_relu, d, num_pos, num_dep)
        in_specs = [
            pl.BlockSpec((bb, d), lambda i: (i, 0)),            # X rows
            pl.BlockSpec(ws_t.shape, lambda i: (0, 0)),         # W_S^T
            pl.BlockSpec(w2.shape, lambda i: (0, 0)),           # fused W2
            pl.BlockSpec(b2.shape, lambda i: (0, 0)),           # fused bias
        ]
        operands = (x, ws_t, w2, b2)
        flops = 2 * B * (d * k + k * n2)
        bytes_accessed = (x.size + ws_t.size + w2.size + b2.size) * in_itemsize + out_bytes

    cost = pl.CostEstimate(flops=flops, transcendentals=0,
                           bytes_accessed=bytes_accessed)

    x_rec, s, pos_logits, dep_logits = pl.pallas_call(
        kernel,
        out_shape=out_shape,
        grid_spec=pltpu.PrefetchScalarGridSpec(
            num_scalar_prefetch=0,
            grid=grid,
            in_specs=in_specs,
            out_specs=out_specs,
        ),
        compiler_params=pltpu.CompilerParams(
            dimension_semantics=("parallel",),
            vmem_limit_bytes=32 << 20),
        cost_estimate=cost,
    )(*operands)
    return x_rec, s, pos_logits, dep_logits


# ----------------------------------------------------------------------------
# Pure-JAX reference + synthetic init + test
# ----------------------------------------------------------------------------
def _reference(x, params, nonlinearity="identity"):
    s = x @ params["W_S"].T
    if nonlinearity == "relu":
        s = jnp.maximum(s, 0.0)
    x_rec = s @ params["W_D"].T
    pos_logits = s @ params["W_pos"].T + params["b_pos"]
    dep_logits = s @ params["W_dep"].T + params["b_dep"]
    return x_rec, s, pos_logits, dep_logits


def init_params(key, d, k, num_pos, num_dep, dtype=jnp.float32):
    """Deterministic synthetic init matching nn.Linear parameter shapes."""
    k1, k2, k3, k4, k5, k6 = jax.random.split(key, 6)
    return {
        "W_S": jax.random.normal(k1, (k, d), dtype) * 0.05,
        "W_D": jax.random.normal(k2, (d, k), dtype) * 0.05,
        "W_pos": jax.random.normal(k3, (num_pos, k), dtype) * 0.05,
        "b_pos": jax.random.normal(k4, (num_pos,), dtype) * 0.05,
        "W_dep": jax.random.normal(k5, (num_dep, k), dtype) * 0.05,
        "b_dep": jax.random.normal(k6, (num_dep,), dtype) * 0.05,
    }


if __name__ == "__main__":
    d, k, num_pos, num_dep = 32, 64, 16, 32
    names = ("x_rec", "S", "pos_logits", "dep_logits")

    key = jax.random.PRNGKey(0)
    kx, kp = jax.random.split(key)
    params = init_params(kp, d, k, num_pos, num_dep)

    # Cases cover: identity (folded single-matmul) path, relu (two-matmul)
    # path, a full-block batch, and a non-multiple-of-8 batch that exercises
    # the partial-block masking and the >=2-step grid split.
    for B, nonlinearity in ((8, "identity"), (30, "identity"), (30, "relu")):
        prepared = prepare_params(params, nonlinearity)   # hoisted weight prep
        x = jax.random.normal(jax.random.fold_in(kx, B), (B, d), jnp.float32)

        outs = supervised_dictionary_learning(x, prepared)
        outs = jax.block_until_ready(outs)

        refs = _reference(x, params, nonlinearity)
        for name, o, r in zip(names, outs, refs):
            assert o.shape == r.shape, (name, o.shape, r.shape)
            assert jnp.allclose(o, r, atol=1e-5, rtol=1e-5), name

    print("KERNEL_OK")
</pallas_src>

<mosaic_0001>
module attributes {stable_mosaic.version = 11 : i64} {
  func.func @_sdl_kernel_identity(%arg0: i32, %arg1: memref<8x32xf32, #tpu.memory_space<vmem>>, %arg2: memref<32x144xf32, #tpu.memory_space<vmem>>, %arg3: memref<1x144xf32, #tpu.memory_space<vmem>>, %arg4: memref<8x32xf32, #tpu.memory_space<vmem>>, %arg5: memref<8x64xf32, #tpu.memory_space<vmem>>, %arg6: memref<8x16xf32, #tpu.memory_space<vmem>>, %arg7: memref<8x32xf32, #tpu.memory_space<vmem>>) attributes {dimension_semantics = [#tpu.dimension_semantics<parallel>], iteration_bounds = array<i64: 1>, scalar_prefetch = 0 : i64, scratch_operands = 0 : i64, tpu.core_type = #tpu.core_type<tc>, window_params = [{transform_indices = @transform_0, window_bounds = array<i64: 8, 32>}, {pipeline_mode = #tpu.pipeline_mode<synchronous>, transform_indices = @transform_1, window_bounds = array<i64: 32, 144>}, {pipeline_mode = #tpu.pipeline_mode<synchronous>, transform_indices = @transform_2, window_bounds = array<i64: 1, 144>}, {transform_indices = @transform_3, window_bounds = array<i64: 8, 32>}, {transform_indices = @transform_4, window_bounds = array<i64: 8, 64>}, {transform_indices = @transform_5, window_bounds = array<i64: 8, 16>}, {transform_indices = @transform_6, window_bounds = array<i64: 8, 32>}]} {
    %c0 = arith.constant 0 : index
    %c0_0 = arith.constant 0 : index
    %0 = vector.load %arg1[%c0, %c0_0] : memref<8x32xf32, #tpu.memory_space<vmem>>, vector<8x32xf32>
    %c0_1 = arith.constant 0 : index
    %c0_2 = arith.constant 0 : index
    %1 = vector.load %arg2[%c0_1, %c0_2] : memref<32x144xf32, #tpu.memory_space<vmem>>, vector<32x144xf32>
    %cst = arith.constant dense<0.000000e+00> : vector<8x144xf32>
    %2 = tpu.matmul %0, %1, %cst {dimension_numbers = #tpu.dot_dimension_numbers<[1], [0], [0], [1], [0, 0, 1, 1], [], []>} : vector<8x32xf32>, vector<32x144xf32>, vector<8x144xf32> -> vector<8x144xf32>
    %c0_3 = arith.constant 0 : index
    %c0_4 = arith.constant 0 : index
    %3 = vector.load %arg3[%c0_3, %c0_4] : memref<1x144xf32, #tpu.memory_space<vmem>>, vector<1x144xf32>
    %4 = vector.broadcast %3 : vector<1x144xf32> to vector<8x144xf32>
    %5 = arith.addf %2, %4 : vector<8x144xf32>
    %6 = vector.extract_strided_slice %5 {offsets = [0, 0], sizes = [8, 64], strides = [1, 1]} : vector<8x144xf32> to vector<8x64xf32>
    %c0_5 = arith.constant 0 : index
    %c0_6 = arith.constant 0 : index
    %7 = vector.load %arg5[%c0_5, %c0_6] : memref<8x64xf32, #tpu.memory_space<vmem>>, vector<8x64xf32>
    tpu.vector_store %arg5[%c0_5, %c0_6], %6 {strides = array<i32>} : memref<8x64xf32, #tpu.memory_space<vmem>>, vector<8x64xf32>,
    %8 = vector.extract_strided_slice %5 {offsets = [0, 64], sizes = [8, 32], strides = [1, 1]} : vector<8x144xf32> to vector<8x32xf32>
    %c0_7 = arith.constant 0 : index
    %c0_8 = arith.constant 0 : index
    %9 = vector.load %arg4[%c0_7, %c0_8] : memref<8x32xf32, #tpu.memory_space<vmem>>, vector<8x32xf32>
    tpu.vector_store %arg4[%c0_7, %c0_8], %8 {strides = array<i32>} : memref<8x32xf32, #tpu.memory_space<vmem>>, vector<8x32xf32>,
    %10 = vector.extract_strided_slice %5 {offsets = [0, 96], sizes = [8, 16], strides = [1, 1]} : vector<8x144xf32> to vector<8x16xf32>
    %c0_9 = arith.constant 0 : index
    %c0_10 = arith.constant 0 : index
    %11 = vector.load %arg6[%c0_9, %c0_10] : memref<8x16xf32, #tpu.memory_space<vmem>>, vector<8x16xf32>
    tpu.vector_store %arg6[%c0_9, %c0_10], %10 {strides = array<i32>} : memref<8x16xf32, #tpu.memory_space<vmem>>, vector<8x16xf32>,
    %12 = vector.extract_strided_slice %5 {offsets = [0, 112], sizes = [8, 32], strides = [1, 1]} : vector<8x144xf32> to vector<8x32xf32>
    %c0_11 = arith.constant 0 : index
    %c0_12 = arith.constant 0 : index
    %13 = vector.load %arg7[%c0_11, %c0_12] : memref<8x32xf32, #tpu.memory_space<vmem>>, vector<8x32xf32>
    tpu.vector_store %arg7[%c0_11, %c0_12], %12 {strides = array<i32>} : memref<8x32xf32, #tpu.memory_space<vmem>>, vector<8x32xf32>,
    return
  }
  func.func @transform_0(%arg0: i32) -> (i32, i32) {
    %c0_i32 = arith.constant 0 : i32
    %c0_i32_0 = arith.constant 0 : i32
    return %arg0, %c0_i32 : i32, i32
  }
  func.func @transform_1(%arg0: i32) -> (i32, i32) {
    %c0_i32 = arith.constant 0 : i32
    %c0_i32_0 = arith.constant 0 : i32
    %c0_i32_1 = arith.constant 0 : i32
    return %c0_i32, %c0_i32_0 : i32, i32
  }
  func.func @transform_2(%arg0: i32) -> (i32, i32) {
    %c0_i32 = arith.constant 0 : i32
    %c0_i32_0 = arith.constant 0 : i32
    %c0_i32_1 = arith.constant 0 : i32
    return %c0_i32, %c0_i32_0 : i32, i32
  }
  func.func @transform_3(%arg0: i32) -> (i32, i32) {
    %c0_i32 = arith.constant 0 : i32
    %c0_i32_0 = arith.constant 0 : i32
    return %arg0, %c0_i32 : i32, i32
  }
  func.func @transform_4(%arg0: i32) -> (i32, i32) {
    %c0_i32 = arith.constant 0 : i32
    %c0_i32_0 = arith.constant 0 : i32
    return %arg0, %c0_i32 : i32, i32
  }
  func.func @transform_5(%arg0: i32) -> (i32, i32) {
    %c0_i32 = arith.constant 0 : i32
    %c0_i32_0 = arith.constant 0 : i32
    return %arg0, %c0_i32 : i32, i32
  }
  func.func @transform_6(%arg0: i32) -> (i32, i32) {
    %c0_i32 = arith.constant 0 : i32
    %c0_i32_0 = arith.constant 0 : i32
    return %arg0, %c0_i32 : i32, i32
  }
}

</mosaic_0001>

<llo_original>
// kernel: tpu_custom_call.1
$region0: #{tpu_custom_call.1}
  #allocation0 [shape = 'u32[]', space=smem, size = 0x4, offset = 0x4, fixed_abs, tag = 'smem constant byte address 0x4 - core index']
  #allocation1 [shape = 'u32[144,128]{1,0:T(1,128)}', space=vmem, size = 0x12000, scoped, tag = 'internal scratch']
  %s0 = inlined_call_operand.hbm [shape: f32[8,32], index: 0, kind: input, shape index: {}]
  %s1 = inlined_call_operand.hbm [shape: f32[32,144], index: 1, kind: input, shape index: {}]
  %s2 = inlined_call_operand.vmem [shape: f32[1,144], index: 2, kind: input, shape index: {}]
  %s3 = inlined_call_operand.hbm [shape: f32[8,32], index: 3, kind: output, shape index: {0}]
  %s4 = inlined_call_operand.hbm [shape: f32[8,64], index: 4, kind: output, shape index: {1}]
  %s5 = inlined_call_operand.hbm [shape: f32[8,16], index: 5, kind: output, shape index: {2}]
  %s6 = inlined_call_operand.hbm [shape: f32[8,32], index: 6, kind: output, shape index: {3}]
  %7 = xla_tuple %s3, %s4, %s5, %s6
  %s8 = sld [smem:[#allocation0]]
  $region54: #{tpu_custom_call.1} parent=0
    _
  %s10 = ssub.s32 1, %s8
  %s11 = scalar_select 0, %s10, %s8
  $region1: #{tpu_custom_call.1} parent=0
    #allocation2 [shape = 'u8[4096]{0}', space=vmem, size = 0x1000, scoped, tag = 'input window, operand 0, single buffered']
    #allocation3 [shape = 's32[1]{0}', space=sflag, size = 0x4, scoped, tag = 'scoped memory for tpu_custom_call.1']
    #allocation4 [shape = 's32[1]{0}', space=sflag, size = 0x4, scoped, tag = 'scoped memory for tpu_custom_call.1']
    #allocation5 [shape = 'u8[32768]{0}', space=vmem, size = 0x8000, scoped, tag = 'input window, operand 1, single buffered']
    #allocation6 [shape = 's32[1]{0}', space=sflag, size = 0x4, scoped, tag = 'scoped memory for tpu_custom_call.1']
    #allocation7 [shape = 'u8[4096]{0}', space=vmem, size = 0x1000, scoped, tag = 'output window, operand 0, single buffered']
    #allocation8 [shape = 'u8[4096]{0}', space=vmem, size = 0x1000, scoped, tag = 'output window, operand 1, single buffered']
    #allocation9 [shape = 's32[1]{0}', space=sflag, size = 0x4, scoped, tag = 'scoped memory for tpu_custom_call.1']
    #allocation10 [shape = 'u8[4096]{0}', space=vmem, size = 0x1000, scoped, tag = 'output window, operand 2, single buffered']
    #allocation11 [shape = 'u8[4096]{0}', space=vmem, size = 0x1000, scoped, tag = 'output window, operand 3, single buffered']
    #allocation12 [shape = 's32[1]{0}', space=sflag, size = 0x4, scoped, tag = 'scoped memory for tpu_custom_call.1']
    %12 = vsyncpa [#allocation3], 0
    %13 = vsyncpa [#allocation6], 0
    %14 = vsyncpa [#allocation4], 0
    %15 = vsyncpa [#allocation9], 0
    %16 = vsyncpa [#allocation12], 0
    // Predicated region
    $region2: #{tpu_custom_call.1} parent=1 // pred_check
      _
    $region3: #{tpu_custom_call.1} parent=1 // pred_check_branch
      %18 = sbr.rel (0) target = $region5
    $region4: #{tpu_custom_call.1} parent=1 // pred_region
      %s20 = ssub.s32 128, 128
      %21 = vsyncadd [#allocation3], %s20
      %s23 = sshll.u32 [#allocation2], 4
      %s24 = int_to_ptr.vmem [resolvable:$true] %s23
      %26 = dma.hbm_to_vmem [thread:$0]  %s0, 128, %s24, [#allocation3]
    $region5: #{tpu_custom_call.1} parent=1 // pred_fallthru
      _
    // Predicated region
    $region6: #{tpu_custom_call.1} parent=1 // pred_check
      _
    $region7: #{tpu_custom_call.1} parent=1 // pred_check_branch
      %28 = sbr.rel (0) target = $region9
    $region8: #{tpu_custom_call.1} parent=1 // pred_region
      %s30 = ssub.s32 1024, 1024
      %31 = vsyncadd [#allocation6], %s30
      %s32 = sshll.u32 [#allocation5], 4
      %s33 = int_to_ptr.vmem [resolvable:$true] %s32
      %38 = dma.hbm_to_vmem [thread:$0]  %s1, 1024, %s33, [#allocation6], 256, 256, 16
    $region9: #{tpu_custom_call.1} parent=1 // pred_fallthru
      _
    // Predicated region
    $region10: #{tpu_custom_call.1} parent=1 // pred_check
      _
    $region11: #{tpu_custom_call.1} parent=1 // pred_check_branch
      %40 = sbr.rel (0) target = $region13
    $region12: #{tpu_custom_call.1} parent=1 // pred_region
      _
    $region13: #{tpu_custom_call.1} parent=1 // pred_fallthru
      _
    // Predicated region
    $region14: #{tpu_custom_call.1} parent=1 // pred_check
      _
    $region15: #{tpu_custom_call.1} parent=1 // pred_check_branch
      %42 = sbr.rel (0) target = $region17
    $region16: #{tpu_custom_call.1} parent=1 // pred_region
      %43 = dma.done [#allocation3], 128
    $region17: #{tpu_custom_call.1} parent=1 // pred_fallthru
      _
    // Predicated region
    $region18: #{tpu_custom_call.1} parent=1 // pred_check
      _
    $region19: #{tpu_custom_call.1} parent=1 // pred_check_branch
      %45 = sbr.rel (0) target = $region21
    $region20: #{tpu_custom_call.1} parent=1 // pred_region
      %46 = dma.done [#allocation6], 1024
    $region21: #{tpu_custom_call.1} parent=1 // pred_fallthru
      _
    %v47 = vld [vmem:[#allocation2] sm:$0xff]
    %v48 = vld [vmem:[#allocation5] sm:$0xff]
    %v49 = vld [vmem:[#allocation5 + $0x8] sm:$0xff]
    %v50 = vld [vmem:[#allocation5 + $0x10] sm:$0xff]
    %v51 = vld [vmem:[#allocation5 + $0x18] sm:$0xff]
    %v52 = vld [vmem:[#allocation5 + $0x20] sm:$0xff]
    %v53 = vld [vmem:[#allocation5 + $0x28] sm:$0xff]
    %v54 = vld [vmem:[#allocation5 + $0x30] sm:$0xff]
    %v55 = vld [vmem:[#allocation5 + $0x38] sm:$0xff]
    %v56 = vld [vmem:[%s2] sm:$0x3]
    %v58 = vlaneseq
    %v59 = vshrl.u32 %v58, 7
    %v60 = vsub.s32 0, %v59
    %v61 = vrot.slane %v56, %v60
    %v62 = vlaneseq
    %v63 = vshrl.u32 %v62, 7
    %v64 = vsub.s32 1, %v63
    %v65 = vrot.slane %v56, %v64
    %vm68 = vcmask 261120
    %v70 = vsel %vm68, %v47, 0
    %72 = vmatprep.subr.mxu0 0.0
    %73 = vmatpush1.msra.mxu0 0.0
    %74 = vmatprep.subr.mxu0 0.0
    %75 = vmatpush1.msra.mxu0 0.0
    %76 = vmatprep.subr.mxu0 0.0
    %77 = vmatpush1.msra.mxu0 0.0
    %78 = vmatprep.subr.mxu0 0.0
    %79 = vmatpush1.msra.mxu0 0.0
    %80 = vmatprep.subr.mxu0 0.0
    %81 = vmatpush1.msra.mxu0 0.0
    %82 = vmatprep.subr.mxu0 0.0
    %83 = vmatpush1.msra.mxu0 0.0
    %84 = vmatprep.subr.mxu0 0.0
    %85 = vmatpush1.msra.mxu0 0.0
    %86 = vmatprep.subr.mxu0 0.0
    %87 = vmatpush1.msra.mxu0 0.0
    %88 = vmatprep.subr.mxu0 0.0
    %89 = vmatpush1.msra.mxu0 0.0
    %90 = vmatprep.subr.mxu0 0.0
    %91 = vmatpush1.msra.mxu0 0.0
    %92 = vmatprep.subr.mxu0 0.0
    %93 = vmatpush1.msra.mxu0 0.0
    %94 = vmatprep.subr.mxu0 0.0
    %95 = vmatpush1.msra.mxu0 0.0
    %96 = vmatprep.subr.mxu0 %v55
    %97 = vmatpush1.msra.mxu0 %v54
    %98 = vmatprep.subr.mxu0 %v53
    %99 = vmatpush1.msra.mxu0 %v52
    %100 = vmatprep.subr.mxu0 %v51
    %101 = vmatpush1.msra.mxu0 %v50
    %102 = vmatprep.subr.mxu0 %v49
    %103 = vmatpush1.msra.mxu0 %v48
    %104 = vmatprep.subr.mxu0 0.0
    %105 = vmatpush2.msra.mxu0 0.0
    %106 = vmatprep.subr.mxu0 0.0
    %107 = vmatpush2.msra.mxu0 0.0
    %108 = vmatprep.subr.mxu0 0.0
    %109 = vmatpush2.msra.mxu0 0.0
    %110 = vmatprep.subr.mxu0 0.0
    %111 = vmatpush2.msra.mxu0 0.0
    %112 = vmatprep.subr.mxu0 0.0
    %113 = vmatpush2.msra.mxu0 0.0
    %114 = vmatprep.subr.mxu0 0.0
    %115 = vmatpush2.msra.mxu0 0.0
    %116 = vmatprep.subr.mxu0 0.0
    %117 = vmatpush2.msra.mxu0 0.0
    %118 = vmatprep.subr.mxu0 0.0
    %119 = vmatpush2.msra.mxu0 0.0
    %120 = vmatprep.subr.mxu0 0.0
    %121 = vmatpush2.msra.mxu0 0.0
    %122 = vmatprep.subr.mxu0 0.0
    %123 = vmatpush2.msra.mxu0 0.0
    %124 = vmatprep.subr.mxu0 0.0
    %125 = vmatpush2.msra.mxu0 0.0
    %126 = vmatprep.subr.mxu0 0.0
    %127 = vmatpush2.msra.mxu0 0.0
    %128 = vmatprep.subr.mxu0 0.0
    %129 = vmatpush2.msra.mxu0 0.0
    %130 = vmatprep.subr.mxu0 0.0
    %131 = vmatpush2.msra.mxu0 0.0
    %132 = vmatprep.subr.mxu0 0.0
    %133 = vmatpush2.msra.mxu0 0.0
    %134 = vmatprep.subr.mxu0 0.0
    %135 = vmatpush2.msra.mxu0 0.0
    %136 = vmatprep.mubr.f32.mxu0 0.0
    %137 = vmatmul.mubr.f32.gmra.mxu0 %v70
    %v138 = vpop.f32.mrf.mxu0
    %v139 = vadd.f32 %v61, %v138
    %v140 = vpop.f32.mrf.mxu0
    %v141 = vadd.f32 %v65, %v140
    %142 = vdwg.mxu0
    %vm143 = vcmask 523264
    %144 = vst.msk [vmem:[#allocation8] sm:$0xff] %vm143, %v139
    %146 = vrot.lane.b32.xlu0 %v139, 64
    %v147 = vpop.permute.xlu0 %146
    %149 = vst.msk [vmem:[#allocation7] sm:$0xff] %vm68, %v147
    %150 = vrot.lane.b32.xlu0 %v139, 32
    %v151 = vpop.permute.xlu0 %150
    %vm153 = vcmask 130048
    %154 = vst.msk [vmem:[#allocation10] sm:$0xff] %vm153, %v151
    %156 = vrot.lane.b32.xlu0 %v139, 16
    %v157 = vpop.permute.xlu0 %156
    %158 = vrot.lane.b32.xlu0 %v141, 16
    %v159 = vpop.permute.xlu0 %158
    %v160 = vsel %vm153, %v157, %v159
    %162 = vst.msk [vmem:[#allocation11] sm:$0xff] %vm68, %v160
    // Predicated region
    $region22: #{tpu_custom_call.1} parent=1 // pred_check
      _
    $region23: #{tpu_custom_call.1} parent=1 // pred_check_branch
      %164 = sbr.rel (0) target = $region25
    $region24: #{tpu_custom_call.1} parent=1 // pred_region
      %s166 = ssub.s32 128, 128
      %167 = vsyncadd [#allocation4], %s166
      %s169 = sshll.u32 [#allocation7], 4
      %s170 = int_to_ptr.vmem [resolvable:$true] %s169
      %172 = dma.vmem_to_hbm [thread:$0]  %s170, 128, %s3, [#allocation4]
    $region25: #{tpu_custom_call.1} parent=1 // pred_fallthru
      _
    // Predicated region
    $region26: #{tpu_custom_call.1} parent=1 // pred_check
      _
    $region27: #{tpu_custom_call.1} parent=1 // pred_check_branch
      %174 = sbr.rel (0) target = $region29
    $region28: #{tpu_custom_call.1} parent=1 // pred_region
      %s176 = ssub.s32 128, 128
      %177 = vsyncadd [#allocation9], %s176
      %s179 = sshll.u32 [#allocation8], 4
      %s180 = int_to_ptr.vmem [resolvable:$true] %s179
      %182 = dma.vmem_to_hbm [thread:$0]  %s180, 128, %s4, [#allocation9]
    $region29: #{tpu_custom_call.1} parent=1 // pred_fallthru
      _
    // Predicated region
    $region30: #{tpu_custom_call.1} parent=1 // pred_check
      _
    $region31: #{tpu_custom_call.1} parent=1 // pred_check_branch
      %184 = sbr.rel (0) target = $region33
    $region32: #{tpu_custom_call.1} parent=1 // pred_region
      %s186 = ssub.s32 128, 128
      %187 = vsyncadd [#allocation9], %s186
      %s189 = sshll.u32 [#allocation10], 4
      %s190 = int_to_ptr.vmem [resolvable:$true] %s189
      %192 = dma.vmem_to_hbm [thread:$0]  %s190, 128, %s5, [#allocation9]
    $region33: #{tpu_custom_call.1} parent=1 // pred_fallthru
      _
    // Predicated region
    $region34: #{tpu_custom_call.1} parent=1 // pred_check
      _
    $region35: #{tpu_custom_call.1} parent=1 // pred_check_branch
      %194 = sbr.rel (0) target = $region37
    $region36: #{tpu_custom_call.1} parent=1 // pred_region
      %s196 = ssub.s32 128, 128
      %197 = vsyncadd [#allocation12], %s196
      %s199 = sshll.u32 [#allocation11], 4
      %s200 = int_to_ptr.vmem [resolvable:$true] %s199
      %202 = dma.vmem_to_hbm [thread:$0]  %s200, 128, %s6, [#allocation12]
    $region37: #{tpu_custom_call.1} parent=1 // pred_fallthru
      _
    // Predicated region
    $region38: #{tpu_custom_call.1} parent=1 // pred_check
      _
    $region39: #{tpu_custom_call.1} parent=1 // pred_check_branch
      %204 = sbr.rel (0) target = $region41
    $region40: #{tpu_custom_call.1} parent=1 // pred_region
      %205 = dma.done [#allocation4], 128
    $region41: #{tpu_custom_call.1} parent=1 // pred_fallthru
      _
    // Predicated region
    $region42: #{tpu_custom_call.1} parent=1 // pred_check
      _
    $region43: #{tpu_custom_call.1} parent=1 // pred_check_branch
      %207 = sbr.rel (0) target = $region45
    $region44: #{tpu_custom_call.1} parent=1 // pred_region
      %208 = dma.done [#allocation9], 128
    $region45: #{tpu_custom_call.1} parent=1 // pred_fallthru
      _
    // Predicated region
    $region46: #{tpu_custom_call.1} parent=1 // pred_check
      _
    $region47: #{tpu_custom_call.1} parent=1 // pred_check_branch
      %210 = sbr.rel (0) target = $region49
    $region48: #{tpu_custom_call.1} parent=1 // pred_region
      %211 = dma.done [#allocation9], 128
    $region49: #{tpu_custom_call.1} parent=1 // pred_fallthru
      _
    // Predicated region
    $region50: #{tpu_custom_call.1} parent=1 // pred_check
      _
    $region51: #{tpu_custom_call.1} parent=1 // pred_check_branch
      %213 = sbr.rel (0) target = $region53
    $region52: #{tpu_custom_call.1} parent=1 // pred_region
      %214 = dma.done [#allocation12], 128
    $region53: #{tpu_custom_call.1} parent=1 // pred_fallthru
      _
    %215 = vsyncpa [#allocation3], 1
    %216 = vsyncpa [#allocation6], 1
    %217 = vsyncpa [#allocation4], 1
    %218 = vsyncpa [#allocation9], 1
    %219 = vsyncpa [#allocation12], 1

</llo_original>
